<compile_context>
chip_gen: v7x
topology: tpu7x:2x2x1
jax: 0.10.0
libtpu: 0.0.40
codegen_flags: <defaults>
</compile_context>

<pallas_src>
import functools

import jax
import jax.numpy as jnp
import numpy as np
from jax.experimental import pallas as pl
from jax.experimental.pallas import tpu as pltpu


def _refine_loss_kernel(theta, pos_weight, n_true, need_row_mask,
                        merged_ref, cls_w_ref, mask_logits_ref, gt_mask_ref,
                        out_ref):
    ci = pl.program_id(0)      # core-split axis ("parallel")
    bi = pl.program_id(1)      # ROI-block axis ("arbitrary", reduction)

    @pl.when(bi == 0)
    def _init():
        out_ref[...] = jnp.zeros_like(out_ref)

    # ---- per-ROI scalars + class logits: one merged lane-dense load ----
    merged = merged_ref[...].astype(jnp.float32)          # [TN, 4 + C]
    iou_pred = merged[:, 0:1]
    gt_iou = merged[:, 1:2]
    w = merged[:, 2:3]                                    # [TN, 1]
    gt_cls = merged[:, 3:4].astype(jnp.int32)             # [TN, 1]
    logits = merged[:, 4:]                                # [TN, C]
    tn, num_cls = logits.shape

    # ---- iou loss: adjust_smooth_l1_loss(|iou_pred - gt_iou|, theta) ----
    y = jnp.abs(iou_pred - gt_iou)
    gf = 1.0 / (2.0 * theta)
    bias = gf * theta * theta
    iou_l = jnp.where(y < theta, y * y * gf, y - theta + bias)        # [TN, 1]

    # ---- cls loss: CrossEntropyLoss(weight=cls_weights, reduction='none') ----
    # loss[n] = -cls_weights[t_n] * log_softmax(logits[n])[t_n]
    clsw = cls_w_ref[...].astype(jnp.float32)                         # [1, C]
    onehot = (jax.lax.broadcasted_iota(jnp.int32, (tn, num_cls), 1) == gt_cls
              ).astype(jnp.float32)                                   # in-kernel one-hot
    m = jnp.max(logits, axis=-1, keepdims=True)
    lse = m + jnp.log(jnp.sum(jnp.exp(logits - m), axis=-1, keepdims=True))
    picked = jnp.sum(logits * onehot, axis=-1, keepdims=True)         # logit at target
    wt = jnp.sum(clsw * onehot, axis=-1, keepdims=True)               # weight at target
    cls_l = wt * (lse - picked)                                       # [TN, 1]

    # ---- seg loss: BCE-with-logits (pos_weight), native-dtype loads, f32 math ----
    x = mask_logits_ref[...].astype(jnp.float32)                      # [TN, HW]
    t = gt_mask_ref[...].astype(jnp.float32)
    sp = jnp.maximum(-x, 0.0) + jnp.log1p(jnp.exp(-jnp.abs(x)))       # softplus(-x)
    if pos_weight == 1.0:
        seg = sp + (1.0 - t) * x
    else:
        seg = ((pos_weight - 1.0) * t + 1.0) * sp + (1.0 - t) * x
    # spatial reduce FIRST, then per-ROI weight (weight-after-reduce)
    seg_row = jnp.sum(seg, axis=-1, keepdims=True)                    # [TN, 1]

    # ---- pack the 4 per-row quantities, single sublane reduce, vector accumulate ----
    ones = jnp.ones_like(w)
    quant = jnp.concatenate([iou_l, cls_l, seg_row, ones], axis=1) * w   # [TN, 4]

    if need_row_mask:
        # exact masking of partial / duplicate edge blocks (never rely on garbage*0)
        row0 = (ci * pl.num_programs(1) + bi) * tn
        row_idx = jax.lax.broadcasted_iota(jnp.int32, (tn, 1), 0)
        row_valid = (row0 + row_idx) < n_true
        quant = jnp.where(row_valid, quant, 0.0)

    out_ref[...] += jnp.sum(quant, axis=0, keepdims=True)[None]          # [1, 1, 4]


def refine_loss(iou_scores, gt_iou, weight, cls_logits, gt_cls, cls_weights,
                mask_logits_flat, gt_mask_flat, *, theta=0.1, pos_weight=1.0,
                tile_n=1024):
    """Forward-pass RefineLoss. GT tensors are the outputs of computeGTfromTarget."""
    n, c = cls_logits.shape
    hw = mask_logits_flat.shape[-1]

    # Merge the four tiny per-ROI scalars + class logits into one f32 array -> one DMA.
    merged = jnp.concatenate(
        [iou_scores.reshape(n, 1).astype(jnp.float32),
         gt_iou.reshape(n, 1).astype(jnp.float32),
         weight.reshape(n, 1).astype(jnp.float32),
         gt_cls.reshape(n, 1).astype(jnp.float32),
         cls_logits.astype(jnp.float32)], axis=1)                    # [N, 4 + C]
    cls_w = cls_weights.reshape(1, c).astype(jnp.float32)            # [1, C]

    # --- ROI tiling (no padding of the big seg arrays; edge blocks masked in-kernel) ---
    if n <= tile_n:
        tile_n = n                     # full-dim block: exempt from the sublane-8 rule
    else:
        tile_n = max(8, (tile_n // 8) * 8)
    num_blocks = -(-n // tile_n)
    n_split = 2 if num_blocks >= 2 else 1        # feed both v7x TensorCores when possible
    bpc = -(-num_blocks // n_split)              # blocks per core (inner grid extent)
    need_row_mask = (n_split * bpc * tile_n) != n

    def roi_map(ci, bi):
        blk = ci * bpc + bi
        if n_split * bpc != num_blocks:          # clamp fully-OOB duplicate blocks
            blk = jnp.minimum(blk, num_blocks - 1)
        return (blk, 0)

    kernel = functools.partial(_refine_loss_kernel, float(theta), float(pos_weight),
                               int(n), bool(need_row_mask))

    out = pl.pallas_call(
        kernel,
        out_shape=jax.ShapeDtypeStruct((n_split, 1, 4), jnp.float32),
        grid=(n_split, bpc),
        in_specs=[
            pl.BlockSpec((tile_n, 4 + c), roi_map),         # merged per-ROI scalars+logits
            pl.BlockSpec((1, c), lambda ci, bi: (0, 0)),    # class weights
            pl.BlockSpec((tile_n, hw), roi_map),            # mask logits (native dtype)
            pl.BlockSpec((tile_n, hw), roi_map),            # gt mask   (native dtype)
        ],
        out_specs=pl.BlockSpec((1, 1, 4), lambda ci, bi: (ci, 0, 0)),
        compiler_params=pltpu.CompilerParams(
            dimension_semantics=("parallel", "arbitrary"),
            vmem_limit_bytes=32 * 1024 * 1024),
    )(merged, cls_w, mask_logits_flat, gt_mask_flat)

    # cross-core combine + normalization (tiny, done in XLA)
    sums = jnp.sum(out, axis=(0, 1))                       # [4] = iou, cls, seg, wsum
    wsum = sums[3] + 0.0001
    return {"iou_loss": sums[0] / wsum,
            "cls_loss": sums[1] / wsum,
            "seg_loss": sums[2] / (wsum * float(hw))}


def _reference(iou_scores, gt_iou, weight, cls_logits, gt_cls, cls_weights,
               mask_logits_flat, gt_mask_flat, theta, pos_weight):
    """Pure-JAX reference of the module's forward loss math (same GT inputs)."""
    f32 = jnp.float32
    iou_pred = iou_scores.astype(f32)
    gt_iou_f = gt_iou.astype(f32)
    w = weight.astype(f32)
    y = jnp.abs(iou_pred - gt_iou_f)
    gf = 1.0 / (2.0 * theta)
    bias = gf * theta * theta
    iou_l = jnp.where(y < theta, y * y * gf, y - theta + bias)

    logp = jax.nn.log_softmax(cls_logits.astype(f32), axis=-1)
    tgt = gt_cls.reshape(-1)
    picked = jnp.take_along_axis(logp, tgt[:, None], axis=-1)
    cls_l = -(cls_weights[tgt][:, None] * picked)

    x = mask_logits_flat.astype(f32)
    t = gt_mask_flat.astype(f32)
    sp = jnp.maximum(-x, 0.0) + jnp.log1p(jnp.exp(-jnp.abs(x)))
    seg = ((pos_weight - 1.0) * t + 1.0) * sp + (1.0 - t) * x
    seg_mean = jnp.mean(seg, axis=-1, keepdims=True)

    wsum = jnp.sum(w) + 0.0001
    return {"iou_loss": jnp.sum(iou_l * w) / wsum,
            "cls_loss": jnp.sum(cls_l * w) / wsum,
            "seg_loss": jnp.sum(seg_mean * w) / wsum}


if __name__ == "__main__":
    key = jax.random.PRNGKey(0)
    N, C, H, W = 8, 5, 28, 28   # 8 ROIs, 5 classes, roi_size=(28, 28) (module default)
    ks = jax.random.split(key, 7)

    # refineNet-style predictions (mask tensors kept bf16: the seg path is HBM-bound)
    mask_logits = jax.random.normal(ks[0], (N, 1, H, W), jnp.float32).astype(jnp.bfloat16)
    cls_logits = jax.random.normal(ks[1], (N, C), jnp.float32)          # cls_logits
    iou_scores = jax.nn.sigmoid(jax.random.normal(ks[2], (N, 1), jnp.float32))

    # TODO(synk): computeGTfromTarget (RoIAlign + per-ROI data-dependent GT matching)
    # has no clean Pallas equivalent; deterministic GT tensors stand in for its output.
    gt_iou = jax.random.uniform(ks[3], (N, 1), jnp.float32)
    gt_cls = jax.random.randint(ks[4], (N, 1), 0, C)                    # valid class ids
    gt_mask = (jax.random.uniform(ks[5], (N, 1, H, W)) > 0.5).astype(jnp.bfloat16)
    weight = jax.random.uniform(ks[6], (N, 1), jnp.float32)

    # deterministic module parameters
    cls_weights = 1.0 + 0.1 * jnp.arange(C, dtype=jnp.float32)
    theta, pos_weight = 0.1, 1.5

    mask_flat = mask_logits.reshape(N, H * W)
    gt_flat = gt_mask.reshape(N, H * W)

    losses = refine_loss(iou_scores, gt_iou, weight, cls_logits, gt_cls, cls_weights,
                         mask_flat, gt_flat, theta=theta, pos_weight=pos_weight)
    losses = jax.block_until_ready(losses)

    ref = _reference(iou_scores, gt_iou, weight, cls_logits, gt_cls, cls_weights,
                     mask_flat, gt_flat, theta, pos_weight)
    for k in ("iou_loss", "cls_loss", "seg_loss"):
        np.testing.assert_allclose(np.asarray(losses[k]), np.asarray(ref[k]),
                                   rtol=1e-4, atol=1e-5)
    print("KERNEL_OK")
</pallas_src>

<mosaic_0001>
module attributes {stable_mosaic.version = 11 : i64} {
  func.func @_refine_loss_kernel(%arg0: i32, %arg1: i32, %arg2: memref<8x9xf32, #tpu.memory_space<vmem>>, %arg3: memref<1x5xf32, #tpu.memory_space<vmem>>, %arg4: memref<8x784xbf16, #tpu.memory_space<vmem>>, %arg5: memref<8x784xbf16, #tpu.memory_space<vmem>>, %arg6: memref<1x1x4xf32, #tpu.memory_space<vmem>>) attributes {dimension_semantics = [#tpu.dimension_semantics<parallel>, #tpu.dimension_semantics<arbitrary>], iteration_bounds = array<i64: 1, 1>, scalar_prefetch = 0 : i64, scratch_operands = 0 : i64, tpu.core_type = #tpu.core_type<tc>, window_params = [{transform_indices = @transform_0, window_bounds = array<i64: 8, 9>}, {pipeline_mode = #tpu.pipeline_mode<synchronous>, transform_indices = @transform_1, window_bounds = array<i64: 1, 5>}, {transform_indices = @transform_2, window_bounds = array<i64: 8, 784>}, {transform_indices = @transform_3, window_bounds = array<i64: 8, 784>}, {transform_indices = @transform_4, window_bounds = array<i64: 1, 1, 4>}]} {
    %c0_i32 = arith.constant 0 : i32
    %0 = arith.cmpi eq, %arg1, %c0_i32 : i32
    %1 = arith.extui %0 : i1 to i32
    %c0_i32_0 = arith.constant 0 : i32
    %2 = arith.cmpi ne, %1, %c0_i32_0 : i32
    scf.if %2 {
      %cst_30 = arith.constant 0.000000e+00 : f32
      %81 = vector.broadcast %cst_30 : f32 to vector<1x1x4xf32>
      %c0_31 = arith.constant 0 : index
      %c0_32 = arith.constant 0 : index
      %c0_33 = arith.constant 0 : index
      %82 = vector.load %arg6[%c0_31, %c0_32, %c0_33] : memref<1x1x4xf32, #tpu.memory_space<vmem>>, vector<1x1x4xf32>
      tpu.vector_store %arg6[%c0_31, %c0_32, %c0_33], %81 {strides = array<i32>} : memref<1x1x4xf32, #tpu.memory_space<vmem>>, vector<1x1x4xf32>,
    } else {
    }
    %c0 = arith.constant 0 : index
    %c0_1 = arith.constant 0 : index
    %3 = vector.load %arg2[%c0, %c0_1] : memref<8x9xf32, #tpu.memory_space<vmem>>, vector<8x9xf32>
    %4 = vector.extract_strided_slice %3 {offsets = [0, 0], sizes = [8, 1], strides = [1, 1]} : vector<8x9xf32> to vector<8x1xf32>
    %5 = vector.extract_strided_slice %3 {offsets = [0, 1], sizes = [8, 1], strides = [1, 1]} : vector<8x9xf32> to vector<8x1xf32>
    %6 = vector.extract_strided_slice %3 {offsets = [0, 2], sizes = [8, 1], strides = [1, 1]} : vector<8x9xf32> to vector<8x1xf32>
    %7 = vector.extract_strided_slice %3 {offsets = [0, 3], sizes = [8, 1], strides = [1, 1]} : vector<8x9xf32> to vector<8x1xf32>
    %8 = arith.fptosi %7 : vector<8x1xf32> to vector<8x1xi32>
    %9 = vector.extract_strided_slice %3 {offsets = [0, 4], sizes = [8, 5], strides = [1, 1]} : vector<8x9xf32> to vector<8x5xf32>
    %10 = arith.subf %4, %5 : vector<8x1xf32>
    %11 = math.absf %10 : vector<8x1xf32>
    %cst = arith.constant 1.000000e-01 : f32
    %12 = vector.broadcast %cst : f32 to vector<8x1xf32>
    %13 = arith.cmpf olt, %11, %12 : vector<8x1xf32>
    %14 = arith.mulf %11, %11 : vector<8x1xf32>
    %cst_2 = arith.constant 5.000000e+00 : f32
    %15 = vector.broadcast %cst_2 : f32 to vector<8x1xf32>
    %16 = arith.mulf %14, %15 : vector<8x1xf32>
    %cst_3 = arith.constant 1.000000e-01 : f32
    %17 = vector.broadcast %cst_3 : f32 to vector<8x1xf32>
    %18 = arith.subf %11, %17 : vector<8x1xf32>
    %cst_4 = arith.constant 5.000000e-02 : f32
    %19 = vector.broadcast %cst_4 : f32 to vector<8x1xf32>
    %20 = arith.addf %18, %19 : vector<8x1xf32>
    %21 = arith.select %13, %16, %20 : vector<8x1xi1>, vector<8x1xf32>
    %c0_5 = arith.constant 0 : index
    %c0_6 = arith.constant 0 : index
    %22 = vector.load %arg3[%c0_5, %c0_6] : memref<1x5xf32, #tpu.memory_space<vmem>>, vector<1x5xf32>
    %23 = tpu.iota {dimensions = array<i32: 1>} : vector<8x5xi32>
    %24 = vector.broadcast %8 : vector<8x1xi32> to vector<8x5xi32>
    %25 = arith.cmpi eq, %23, %24 : vector<8x5xi32>
    %26 = arith.extui %25 : vector<8x5xi1> to vector<8x5xi32>
    %27 = arith.sitofp %26 : vector<8x5xi32> to vector<8x5xf32>
    %cst_7 = arith.constant dense<0xFF800000> : vector<8xf32>
    %28 = vector.multi_reduction <maximumf>, %9, %cst_7 [1] : vector<8x5xf32> to vector<8xf32>
    %29 = vector.shape_cast %28 : vector<8xf32> to vector<8x1xf32>
    %30 = vector.broadcast %29 : vector<8x1xf32> to vector<8x5xf32>
    %31 = arith.subf %9, %30 : vector<8x5xf32>
    %32 = math.exp %31 : vector<8x5xf32>
    %cst_8 = arith.constant dense<0.000000e+00> : vector<8xf32>
    %33 = vector.multi_reduction <add>, %32, %cst_8 [1] : vector<8x5xf32> to vector<8xf32>
    %34 = vector.shape_cast %33 : vector<8xf32> to vector<8x1xf32>
    %35 = math.log %34 : vector<8x1xf32>
    %36 = arith.addf %29, %35 : vector<8x1xf32>
    %37 = arith.mulf %9, %27 : vector<8x5xf32>
    %cst_9 = arith.constant dense<0.000000e+00> : vector<8xf32>
    %38 = vector.multi_reduction <add>, %37, %cst_9 [1] : vector<8x5xf32> to vector<8xf32>
    %39 = vector.shape_cast %38 : vector<8xf32> to vector<8x1xf32>
    %40 = vector.broadcast %22 : vector<1x5xf32> to vector<8x5xf32>
    %41 = arith.mulf %40, %27 : vector<8x5xf32>
    %cst_10 = arith.constant dense<0.000000e+00> : vector<8xf32>
    %42 = vector.multi_reduction <add>, %41, %cst_10 [1] : vector<8x5xf32> to vector<8xf32>
    %43 = vector.shape_cast %42 : vector<8xf32> to vector<8x1xf32>
    %44 = arith.subf %36, %39 : vector<8x1xf32>
    %45 = arith.mulf %43, %44 : vector<8x1xf32>
    %c0_11 = arith.constant 0 : index
    %c0_12 = arith.constant 0 : index
    %46 = vector.load %arg4[%c0_11, %c0_12] : memref<8x784xbf16, #tpu.memory_space<vmem>>, vector<8x784xbf16>
    %47 = arith.extf %46 : vector<8x784xbf16> to vector<8x784xf32>
    %c0_13 = arith.constant 0 : index
    %c0_14 = arith.constant 0 : index
    %48 = vector.load %arg5[%c0_13, %c0_14] : memref<8x784xbf16, #tpu.memory_space<vmem>>, vector<8x784xbf16>
    %49 = arith.extf %48 : vector<8x784xbf16> to vector<8x784xf32>
    %cst_15 = arith.constant 0.000000e+00 : f32
    %50 = vector.broadcast %cst_15 : f32 to vector<8x784xf32>
    %51 = arith.subf %50, %47 : vector<8x784xf32>
    %cst_16 = arith.constant 0.000000e+00 : f32
    %52 = vector.broadcast %cst_16 : f32 to vector<8x784xf32>
    %53 = arith.maximumf %51, %52 : vector<8x784xf32>
    %54 = math.absf %47 : vector<8x784xf32>
    %cst_17 = arith.constant 0.000000e+00 : f32
    %55 = vector.broadcast %cst_17 : f32 to vector<8x784xf32>
    %56 = arith.subf %55, %54 : vector<8x784xf32>
    %57 = math.exp %56 : vector<8x784xf32>
    %58 = math.log1p %57 : vector<8x784xf32>
    %59 = arith.addf %53, %58 : vector<8x784xf32>
    %cst_18 = arith.constant 5.000000e-01 : f32
    %60 = vector.broadcast %cst_18 : f32 to vector<8x784xf32>
    %61 = arith.mulf %60, %49 : vector<8x784xf32>
    %cst_19 = arith.constant 1.000000e+00 : f32
    %62 = vector.broadcast %cst_19 : f32 to vector<8x784xf32>
    %63 = arith.addf %61, %62 : vector<8x784xf32>
    %64 = arith.mulf %63, %59 : vector<8x784xf32>
    %cst_20 = arith.constant 1.000000e+00 : f32
    %65 = vector.broadcast %cst_20 : f32 to vector<8x784xf32>
    %66 = arith.subf %65, %49 : vector<8x784xf32>
    %67 = arith.mulf %66, %47 : vector<8x784xf32>
    %68 = arith.addf %64, %67 : vector<8x784xf32>
    %cst_21 = arith.constant dense<0.000000e+00> : vector<8xf32>
    %69 = vector.multi_reduction <add>, %68, %cst_21 [1] : vector<8x784xf32> to vector<8xf32>
    %70 = vector.shape_cast %69 : vector<8xf32> to vector<8x1xf32>
    %cst_22 = arith.constant 1.000000e+00 : f32
    %71 = vector.broadcast %cst_22 : f32 to vector<8x1xf32>
    %72 = tpu.concatenate %21, %45, %70, %71 in 1 : vector<8x1xf32>, vector<8x1xf32>, vector<8x1xf32>, vector<8x1xf32> -> vector<8x4xf32>
    %73 = vector.broadcast %6 : vector<8x1xf32> to vector<8x4xf32>
    %74 = arith.mulf %72, %73 : vector<8x4xf32>
    %c0_23 = arith.constant 0 : index
    %c0_24 = arith.constant 0 : index
    %c0_25 = arith.constant 0 : index
    %75 = vector.load %arg6[%c0_23, %c0_24, %c0_25] : memref<1x1x4xf32, #tpu.memory_space<vmem>>, vector<1x1x4xf32>
    %cst_26 = arith.constant dense<0.000000e+00> : vector<4xf32>
    %76 = vector.multi_reduction <add>, %74, %cst_26 [0] : vector<8x4xf32> to vector<4xf32>
    %77 = vector.shape_cast %76 : vector<4xf32> to vector<1x4xf32>
    %78 = vector.shape_cast %77 : vector<1x4xf32> to vector<1x1x4xf32>
    %79 = arith.addf %75, %78 : vector<1x1x4xf32>
    %c0_27 = arith.constant 0 : index
    %c0_28 = arith.constant 0 : index
    %c0_29 = arith.constant 0 : index
    %80 = vector.load %arg6[%c0_27, %c0_28, %c0_29] : memref<1x1x4xf32, #tpu.memory_space<vmem>>, vector<1x1x4xf32>
    tpu.vector_store %arg6[%c0_27, %c0_28, %c0_29], %79 {strides = array<i32>} : memref<1x1x4xf32, #tpu.memory_space<vmem>>, vector<1x1x4xf32>,
    return
  }
  func.func @transform_0(%arg0: i32, %arg1: i32) -> (i32, i32) {
    %c1_i32 = arith.constant 1 : i32
    %0 = arith.muli %arg0, %c1_i32 : i32
    %1 = arith.addi %0, %arg1 : i32
    %c0_i32 = arith.constant 0 : i32
    %c0_i32_0 = arith.constant 0 : i32
    return %1, %c0_i32 : i32, i32
  }
  func.func @transform_1(%arg0: i32, %arg1: i32) -> (i32, i32) {
    %c0_i32 = arith.constant 0 : i32
    %c0_i32_0 = arith.constant 0 : i32
    %c0_i32_1 = arith.constant 0 : i32
    return %c0_i32, %c0_i32_0 : i32, i32
  }
  func.func @transform_2(%arg0: i32, %arg1: i32) -> (i32, i32) {
    %c1_i32 = arith.constant 1 : i32
    %0 = arith.muli %arg0, %c1_i32 : i32
    %1 = arith.addi %0, %arg1 : i32
    %c0_i32 = arith.constant 0 : i32
    %c0_i32_0 = arith.constant 0 : i32
    return %1, %c0_i32 : i32, i32
  }
  func.func @transform_3(%arg0: i32, %arg1: i32) -> (i32, i32) {
    %c1_i32 = arith.constant 1 : i32
    %0 = arith.muli %arg0, %c1_i32 : i32
    %1 = arith.addi %0, %arg1 : i32
    %c0_i32 = arith.constant 0 : i32
    %c0_i32_0 = arith.constant 0 : i32
    return %1, %c0_i32 : i32, i32
  }
  func.func @transform_4(%arg0: i32, %arg1: i32) -> (i32, i32, i32) {
    %c0_i32 = arith.constant 0 : i32
    %c0_i32_0 = arith.constant 0 : i32
    %c0_i32_1 = arith.constant 0 : i32
    return %arg0, %c0_i32, %c0_i32_0 : i32, i32, i32
  }
}

</mosaic_0001>

<llo_original>
// kernel: tpu_custom_call.1
$region0: #{tpu_custom_call.1}
  #allocation0 [shape = 'u32[]', space=smem, size = 0x4, offset = 0x4, fixed_abs, tag = 'smem constant byte address 0x4 - core index']
  #allocation1 [shape = 'u32[144,128]{1,0:T(1,128)}', space=vmem, size = 0x12000, scoped, tag = 'internal scratch']
  %s0 = inlined_call_operand.hbm [shape: f32[8,9], index: 0, kind: input, shape index: {}]
  %s1 = inlined_call_operand.vmem [shape: f32[1,5], index: 1, kind: input, shape index: {}]
  %s2 = inlined_call_operand.hbm [shape: bf16[8,784], index: 2, kind: input, shape index: {}]
  %s3 = inlined_call_operand.hbm [shape: bf16[8,784], index: 3, kind: input, shape index: {}]
  %s4 = inlined_call_operand.hbm [shape: f32[1,1,4], index: 4, kind: output, shape index: {}]
  %s5 = sld [smem:[#allocation0]]
  $region42: #{tpu_custom_call.1} parent=0
    _
  %s7 = ssub.s32 1, %s5
  %s8 = scalar_select 0, %s7, %s5
  $region1: #{tpu_custom_call.1} parent=0
    #allocation2 [shape = 'u8[4096]{0}', space=vmem, size = 0x1000, scoped, tag = 'input window, operand 0, single buffered']
    #allocation3 [shape = 's32[1]{0}', space=sflag, size = 0x4, scoped, tag = 'scoped memory for tpu_custom_call.1']
    #allocation4 [shape = 's32[1]{0}', space=sflag, size = 0x4, scoped, tag = 'scoped memory for tpu_custom_call.1']
    #allocation5 [shape = 'u8[14336]{0}', space=vmem, size = 0x3800, scoped, tag = 'input window, operand 2, single buffered']
    #allocation6 [shape = 's32[1]{0}', space=sflag, size = 0x4, scoped, tag = 'scoped memory for tpu_custom_call.1']
    #allocation7 [shape = 'u8[14336]{0}', space=vmem, size = 0x3800, scoped, tag = 'input window, operand 3, single buffered']
    #allocation8 [shape = 'u8[512]{0}', space=vmem, size = 0x400, scoped, tag = 'output window, operand 0, single buffered']
    %9 = vsyncpa [#allocation3], 0
    %10 = vsyncpa [#allocation6], 0
    %11 = vsyncpa [#allocation4], 0
    // Predicated region
    $region2: #{tpu_custom_call.1} parent=1 // pred_check
      _
    $region3: #{tpu_custom_call.1} parent=1 // pred_check_branch
      %13 = sbr.rel (0) target = $region5
    $region4: #{tpu_custom_call.1} parent=1 // pred_region
      %s14 = sadd.s32 0, 0
      %s16 = ssub.s32 128, 128
      %17 = vsyncadd [#allocation3], %s16
      %s18 = smul.addr %s14, 128
      %s19 = scalar_lea.hbm %s0, %s18
      %s21 = sshll.u32 [#allocation2], 4
      %s22 = int_to_ptr.vmem [resolvable:$true] %s21
      %24 = dma.hbm_to_vmem [thread:$0]  %s19, 128, %s22, [#allocation3]
    $region5: #{tpu_custom_call.1} parent=1 // pred_fallthru
      _
    // Predicated region
    $region6: #{tpu_custom_call.1} parent=1 // pred_check
      _
    $region7: #{tpu_custom_call.1} parent=1 // pred_check_branch
      %26 = sbr.rel (0) target = $region9
    $region8: #{tpu_custom_call.1} parent=1 // pred_region
      _
    $region9: #{tpu_custom_call.1} parent=1 // pred_fallthru
      _
    // Predicated region
    $region10: #{tpu_custom_call.1} parent=1 // pred_check
      _
    $region11: #{tpu_custom_call.1} parent=1 // pred_check_branch
      %28 = sbr.rel (0) target = $region13
    $region12: #{tpu_custom_call.1} parent=1 // pred_region
      %s29 = sadd.s32 0, 0
      %s31 = ssub.s32 448, 448
      %32 = vsyncadd [#allocation6], %s31
      %s33 = smul.addr %s29, 7
      %s34 = smul.addr %s33, 64
      %s35 = scalar_lea.hbm %s2, %s34
      %s37 = sshll.u32 [#allocation5], 4
      %s38 = int_to_ptr.vmem [resolvable:$true] %s37
      %40 = dma.hbm_to_vmem [thread:$0]  %s35, 448, %s38, [#allocation6]
    $region13: #{tpu_custom_call.1} parent=1 // pred_fallthru
      _
    // Predicated region
    $region14: #{tpu_custom_call.1} parent=1 // pred_check
      _
    $region15: #{tpu_custom_call.1} parent=1 // pred_check_branch
      %42 = sbr.rel (0) target = $region17
    $region16: #{tpu_custom_call.1} parent=1 // pred_region
      %s43 = sadd.s32 0, 0
      %s45 = ssub.s32 448, 448
      %46 = vsyncadd [#allocation6], %s45
      %s47 = smul.addr %s43, 7
      %s48 = smul.addr %s47, 64
      %s49 = scalar_lea.hbm %s3, %s48
      %s51 = sshll.u32 [#allocation7], 4
      %s52 = int_to_ptr.vmem [resolvable:$true] %s51
      %54 = dma.hbm_to_vmem [thread:$0]  %s49, 448, %s52, [#allocation6]
    $region17: #{tpu_custom_call.1} parent=1 // pred_fallthru
      _
    // Predicated region
    $region18: #{tpu_custom_call.1} parent=1 // pred_check
      _
    $region19: #{tpu_custom_call.1} parent=1 // pred_check_branch
      %56 = sbr.rel (0) target = $region21
    $region20: #{tpu_custom_call.1} parent=1 // pred_region
      %57 = dma.done [#allocation3], 128
    $region21: #{tpu_custom_call.1} parent=1 // pred_fallthru
      _
    // Predicated region
    $region22: #{tpu_custom_call.1} parent=1 // pred_check
      _
    $region23: #{tpu_custom_call.1} parent=1 // pred_check_branch
      %59 = sbr.rel (0) target = $region25
    $region24: #{tpu_custom_call.1} parent=1 // pred_region
      %60 = dma.done [#allocation6], 448
    $region25: #{tpu_custom_call.1} parent=1 // pred_fallthru
      _
    // Predicated region
    $region26: #{tpu_custom_call.1} parent=1 // pred_check
      _
    $region27: #{tpu_custom_call.1} parent=1 // pred_check_branch
      %62 = sbr.rel (0) target = $region29
    $region28: #{tpu_custom_call.1} parent=1 // pred_region
      %63 = dma.done [#allocation6], 448
    $region29: #{tpu_custom_call.1} parent=1 // pred_fallthru
      _
    %s64 = sadd.s32 0, 0
    %s65 = sadd.s32 0, 0
    %s66 = sadd.s32 0, 0
    %p67 = scmp.eq.s32.totalorder 0, 0
    // Predicated region
    $region30: #{tpu_custom_call.1} parent=1 // pred_check
      %p68 = pneg %p67
    $region31: #{tpu_custom_call.1} parent=1 // pred_check_branch
      %70 = sbr.rel (%p68) target = $region33
    $region32: #{tpu_custom_call.1} parent=1 // pred_region
      %vm71 = vcmask 24576
      %72 = vst.msk [vmem:[#allocation8] sm:$0x1] %vm71, 0.0
    $region33: #{tpu_custom_call.1} parent=1 // pred_fallthru
      _
    %v73 = vld [vmem:[#allocation2] sm:$0xff]
    %v74 = vcvt.f32.s32.to.zero.pseudo %v73
    %76 = vrot.lane.b32.xlu0 %v73, 127
    %v77 = vpop.permute.xlu0 %76
    %v79 = vsub.f32 %v73, %v77
    %v80 = vand.u32 2147483647, %v79
    %vm81 = vcmp.lt.f32.partialorder %v80, 0.1
    %v82 = vmul.f32 %v80, %v80
    %v83 = vmul.f32 %v82, 5.0
    %v84 = vsub.f32 %v80, 0.1
    %v85 = vadd.f32 %v84, 0.05
    %v86 = vsel %vm81, %v83, %v85
    %v87 = vld [vmem:[%s1] sm:$0x1]
    %v88 = vlaneseq
    %v89 = vand.u32 %v88, 127
    %90 = vset.pattern.permute.xlu0 3
    %91 = vperm.xlu0 %90, %v74
    %v92 = vpop.permute.xlu0 %91
    %vm93 = vcmp.eq.s32.totalorder %v89, %v92
    %v94 = vsel %vm93, 1, 0
    %v95 = vcvt.s32.f32 %v94
    %vm96 = vcmask 72736
    %v97 = vsel %vm96, %v73, -inf
    %98 = vmax.xlane.f32.xlu0 %v97
    %v99 = vpop.xlane.xlu0 %98
    %v100 = vsub.f32 %v73, %v99
    %v101 = vmul.f32 %v100, 1.442695
    %v102 = vpow.pop %v101
    %104 = vrot.lane.b32.xlu0 %v102, 124
    %v105 = vpop.permute.xlu0 %104
    %vm107 = vcmask 39936
    %v108 = vsel %vm107, %v105, 0.0
    %109 = vadd.xlane.f32.xlu0 %v108
    %v110 = vpop.xlane.xlu0 %109
    %v111 = vlog2.pop %v110
    %v112 = vmul.f32 %v111, 0.6931472
    %v113 = vadd.f32 %v99, %v112
    %115 = vrot.lane.b32.xlu0 %v95, 4
    %v116 = vpop.permute.xlu0 %115
    %v118 = vmul.f32 %v73, %v116
    %120 = vrot.lane.b32.xlu0 %v118, 124
    %v121 = vpop.permute.xlu0 %120
    %v123 = vsel %vm107, %v121, 0.0
    %124 = vadd.xlane.f32.xlu0 %v123
    %v125 = vpop.xlane.xlu0 %124
    %v127 = vlaneseq
    %v128 = vshrl.u32 %v127, 7
    %v129 = vsub.s32 0, %v128
    %v130 = vrot.slane %v87, %v129
    %v132 = vmul.f32 %v130, %v95
    %v133 = vsel %vm107, %v132, 0.0
    %134 = vadd.xlane.f32.xlu0 %v133
    %v135 = vpop.xlane.xlu0 %134
    %v136 = vsub.f32 %v113, %v125
    %v137 = vmul.f32 %v135, %v136
    %v138 = vld [vmem:[#allocation5] sm:$0xff]
    %v139 = vld [vmem:[#allocation5 + $0x8] sm:$0xff]
    %v140 = vld [vmem:[#allocation5 + $0x10] sm:$0xff]
    %v141 = vld [vmem:[#allocation5 + $0x18] sm:$0xf]
    %v142 = vunpack.c.l.bf16 %v138
    %v143 = vunpack.c.h.bf16 %v138
    %v144 = vunpack.c.l.bf16 %v139
    %v145 = vunpack.c.h.bf16 %v139
    %v146 = vunpack.c.l.bf16 %v140
    %v147 = vunpack.c.h.bf16 %v140
    %v148 = vunpack.c.l.bf16 %v141
    %v149 = vld [vmem:[#allocation7] sm:$0xff]
    %v150 = vld [vmem:[#allocation7 + $0x8] sm:$0xff]
    %v151 = vld [vmem:[#allocation7 + $0x10] sm:$0xff]
    %v152 = vld [vmem:[#allocation7 + $0x18] sm:$0xf]
    %v153 = vunpack.c.l.bf16 %v149
    %v154 = vunpack.c.h.bf16 %v149
    %v155 = vunpack.c.l.bf16 %v150
    %v156 = vunpack.c.h.bf16 %v150
    %v157 = vunpack.c.l.bf16 %v151
    %v158 = vunpack.c.h.bf16 %v151
    %v159 = vunpack.c.l.bf16 %v152
    %v160 = vsub.f32 0.0, %v142
    %v161 = vsub.f32 0.0, %v143
    %v162 = vsub.f32 0.0, %v144
    %v163 = vsub.f32 0.0, %v145
    %v164 = vsub.f32 0.0, %v146
    %v165 = vsub.f32 0.0, %v147
    %v166 = vsub.f32 0.0, %v148
    %v167 = vmax.f32 %v160, 0.0
    %v168 = vmax.f32 %v161, 0.0
    %v169 = vmax.f32 %v162, 0.0
    %v170 = vmax.f32 %v163, 0.0
    %v171 = vmax.f32 %v164, 0.0
    %v172 = vmax.f32 %v165, 0.0
    %v173 = vmax.f32 %v166, 0.0
    %v174 = vand.u32 2147483647, %v142
    %v175 = vand.u32 2147483647, %v143
    %v176 = vand.u32 2147483647, %v144
    %v177 = vand.u32 2147483647, %v145
    %v178 = vand.u32 2147483647, %v146
    %v179 = vand.u32 2147483647, %v147
    %v180 = vand.u32 2147483647, %v148
    %v181 = vsub.f32 0.0, %v174
    %v182 = vsub.f32 0.0, %v175
    %v183 = vsub.f32 0.0, %v176
    %v184 = vsub.f32 0.0, %v177
    %v185 = vsub.f32 0.0, %v178
    %v186 = vsub.f32 0.0, %v179
    %v187 = vsub.f32 0.0, %v180
    %v188 = vmul.f32 %v181, 1.442695
    %v189 = vpow.pop %v188
    %v190 = vmul.f32 %v182, 1.442695
    %v191 = vpow.pop %v190
    %v192 = vmul.f32 %v183, 1.442695
    %v193 = vpow.pop %v192
    %v194 = vmul.f32 %v184, 1.442695
    %v195 = vpow.pop %v194
    %v196 = vmul.f32 %v185, 1.442695
    %v197 = vpow.pop %v196
    %v198 = vmul.f32 %v186, 1.442695
    %v199 = vpow.pop %v198
    %v200 = vmul.f32 %v187, 1.442695
    %v201 = vpow.pop %v200
    %v202 = vadd.f32 %v189, 1.0
    %v203 = vlog2.pop %v202
    %v204 = vmul.f32 %v203, 0.6931472
    %v205 = vmul.f32 -0.5, %v189
    %v206 = vadd.f32 %v205, 1.0
    %v207 = vmul.f32 %v206, %v189
    %v208 = vand.u32 2147483647, %v189
    %vm209 = vcmp.lt.f32.partialorder %v208, 0.0004427343
    %v210 = vsel %vm209, %v207, %v204
    %v211 = vadd.f32 %v191, 1.0
    %v212 = vlog2.pop %v211
    %v213 = vmul.f32 %v212, 0.6931472
    %v214 = vmul.f32 -0.5, %v191
    %v215 = vadd.f32 %v214, 1.0
    %v216 = vmul.f32 %v215, %v191
    %v217 = vand.u32 2147483647, %v191
    %vm218 = vcmp.lt.f32.partialorder %v217, 0.0004427343
    %v219 = vsel %vm218, %v216, %v213
    %v220 = vadd.f32 %v193, 1.0
    %v221 = vlog2.pop %v220
    %v222 = vmul.f32 %v221, 0.6931472
    %v223 = vmul.f32 -0.5, %v193
    %v224 = vadd.f32 %v223, 1.0
    %v225 = vmul.f32 %v224, %v193
    %v226 = vand.u32 2147483647, %v193
    %vm227 = vcmp.lt.f32.partialorder %v226, 0.0004427343
    %v228 = vsel %vm227, %v225, %v222
    %v229 = vadd.f32 %v195, 1.0
    %v230 = vlog2.pop %v229
    %v231 = vmul.f32 %v230, 0.6931472
    %v232 = vmul.f32 -0.5, %v195
    %v233 = vadd.f32 %v232, 1.0
    %v234 = vmul.f32 %v233, %v195
    %v235 = vand.u32 2147483647, %v195
    %vm236 = vcmp.lt.f32.partialorder %v235, 0.0004427343
    %v237 = vsel %vm236, %v234, %v231
    %v238 = vadd.f32 %v197, 1.0
    %v239 = vlog2.pop %v238
    %v240 = vmul.f32 %v239, 0.6931472
    %v241 = vmul.f32 -0.5, %v197
    %v242 = vadd.f32 %v241, 1.0
    %v243 = vmul.f32 %v242, %v197
    %v244 = vand.u32 2147483647, %v197
    %vm245 = vcmp.lt.f32.partialorder %v244, 0.0004427343
    %v246 = vsel %vm245, %v243, %v240
    %v247 = vadd.f32 %v199, 1.0
    %v248 = vlog2.pop %v247
    %v249 = vmul.f32 %v248, 0.6931472
    %v250 = vmul.f32 -0.5, %v199
    %v251 = vadd.f32 %v250, 1.0
    %v252 = vmul.f32 %v251, %v199
    %v253 = vand.u32 2147483647, %v199
    %vm254 = vcmp.lt.f32.partialorder %v253, 0.0004427343
    %v255 = vsel %vm254, %v252, %v249
    %v256 = vadd.f32 %v201, 1.0
    %v257 = vlog2.pop %v256
    %v258 = vmul.f32 %v257, 0.6931472
    %v259 = vmul.f32 -0.5, %v201
    %v260 = vadd.f32 %v259, 1.0
    %v261 = vmul.f32 %v260, %v201
    %v262 = vand.u32 2147483647, %v201
    %vm263 = vcmp.lt.f32.partialorder %v262, 0.0004427343
    %v264 = vsel %vm263, %v261, %v258
    %v265 = vadd.f32 %v167, %v210
    %v266 = vadd.f32 %v168, %v219
    %v267 = vadd.f32 %v169, %v228
    %v268 = vadd.f32 %v170, %v237
    %v269 = vadd.f32 %v171, %v246
    %v270 = vadd.f32 %v172, %v255
    %v271 = vadd.f32 %v173, %v264
    %v272 = vmul.f32 %v153, 0.5
    %v273 = vmul.f32 %v154, 0.5
    %v274 = vmul.f32 %v155, 0.5
    %v275 = vmul.f32 %v156, 0.5
    %v276 = vmul.f32 %v157, 0.5
    %v277 = vmul.f32 %v158, 0.5
    %v278 = vmul.f32 %v159, 0.5
    %v279 = vadd.f32 %v272, 1.0
    %v280 = vadd.f32 %v273, 1.0
    %v281 = vadd.f32 %v274, 1.0
    %v282 = vadd.f32 %v275, 1.0
    %v283 = vadd.f32 %v276, 1.0
    %v284 = vadd.f32 %v277, 1.0
    %v285 = vadd.f32 %v278, 1.0
    %v286 = vmul.f32 %v279, %v265
    %v287 = vmul.f32 %v280, %v266
    %v288 = vmul.f32 %v281, %v267
    %v289 = vmul.f32 %v282, %v268
    %v290 = vmul.f32 %v283, %v269
    %v291 = vmul.f32 %v284, %v270
    %v292 = vmul.f32 %v285, %v271
    %v293 = vsub.f32 1.0, %v153
    %v294 = vsub.f32 1.0, %v154
    %v295 = vsub.f32 1.0, %v155
    %v296 = vsub.f32 1.0, %v156
    %v297 = vsub.f32 1.0, %v157
    %v298 = vsub.f32 1.0, %v158
    %v299 = vsub.f32 1.0, %v159
    %v300 = vmul.f32 %v293, %v142
    %v301 = vmul.f32 %v294, %v143
    %v302 = vmul.f32 %v295, %v144
    %v303 = vmul.f32 %v296, %v145
    %v304 = vmul.f32 %v297, %v146
    %v305 = vmul.f32 %v298, %v147
    %v306 = vmul.f32 %v299, %v148
    %v307 = vadd.f32 %v286, %v300
    %v308 = vadd.f32 %v287, %v301
    %v309 = vadd.f32 %v288, %v302
    %v310 = vadd.f32 %v289, %v303
    %v311 = vadd.f32 %v290, %v304
    %v312 = vadd.f32 %v291, %v305
    %v313 = vadd.f32 %v292, %v306
    %v314 = vadd.f32 %v307, %v308
    %v315 = vadd.f32 %v314, %v309
    %v316 = vadd.f32 %v315, %v310
    %v317 = vadd.f32 %v316, %v311
    %v318 = vadd.f32 %v317, %v312
    %vm319 = vcmask 130048
    %v320 = vsel %vm319, %v313, 0.0
    %v321 = vadd.f32 %v318, %v320
    %322 = vadd.xlane.f32.xlu0 %v321
    %v323 = vpop.xlane.xlu0 %322
    %vm324 = vcmask 7168
    %v325 = vsel %vm324, %v86, %v137
    %vm326 = vcmask 15360
    %v327 = vsel %vm326, %v325, %v323
    %vm328 = vcmask 23552
    %v329 = vsel %vm328, %v327, 1.0
    %330 = vset.pattern.permute.xlu0 2
    %331 = vperm.xlu0 %330, %v73
    %v332 = vpop.permute.xlu0 %331
    %v334 = vmul.f32 %v329, %v332
    %v335 = vld [vmem:[#allocation8] sm:$0x1]
    %vm336 = vcmask 31744
    %v337 = vsel %vm336, %v334, 0.0
    %v338 = vrot.slane %v337, 4
    %v339 = vadd.f32 %v337, %v338
    %v340 = vrot.slane %v339, 2
    %v341 = vadd.f32 %v339, %v340
    %v342 = vrot.slane %v341, 1
    %v343 = vadd.f32 %v341, %v342
    %v344 = vadd.f32 %v335, %v343
    %vm345 = vcmask 24576
    %346 = vst.msk [vmem:[#allocation8] sm:$0x1] %vm345, %v344
    // Predicated region
    $region34: #{tpu_custom_call.1} parent=1 // pred_check
      _
    $region35: #{tpu_custom_call.1} parent=1 // pred_check_branch
      %348 = sbr.rel (0) target = $region37
    $region36: #{tpu_custom_call.1} parent=1 // pred_region
      %s350 = ssub.s32 16, 16
      %351 = vsyncadd [#allocation4], %s350
      %s353 = sshll.u32 [#allocation8], 4
      %s354 = int_to_ptr.vmem [resolvable:$true] %s353
      %356 = dma.vmem_to_hbm [thread:$0]  %s354, 16, %s4, [#allocation4]
    $region37: #{tpu_custom_call.1} parent=1 // pred_fallthru
      _
    // Predicated region
    $region38: #{tpu_custom_call.1} parent=1 // pred_check
      _
    $region39: #{tpu_custom_call.1} parent=1 // pred_check_branch
      %358 = sbr.rel (0) target = $region41
    $region40: #{tpu_custom_call.1} parent=1 // pred_region
      %359 = dma.done [#allocation4], 16
    $region41: #{tpu_custom_call.1} parent=1 // pred_fallthru
      _
    %360 = vsyncpa [#allocation3], 1
    %361 = vsyncpa [#allocation6], 1
    %362 = vsyncpa [#allocation4], 1

</llo_original>
